<compile_context>
chip_gen: v6e
topology: v6e:2x2x1
jax: 0.10.0
libtpu: 0.0.40
codegen_flags: <defaults>
</compile_context>

<pallas_src>
import functools

import jax
import jax.numpy as jnp
from jax.experimental import pallas as pl
from jax.experimental.pallas import tpu as pltpu

_MIB = 1024 * 1024


def _cdiv(a, b):
    return -(-a // b)


def _round_up(x, m):
    return _cdiv(x, m) * m


def _vmem_capacity_bytes():
    """Per-core VMEM capacity; conservative 64 MiB (v7x) if query fails."""
    try:
        return int(pltpu.get_tpu_info().vmem_capacity_bytes)
    except Exception:
        return 64 * _MIB


def _pick_tile(dim, pref):
    """Largest multiple of 128 <= min(pref, dim) that divides dim (dim % 128 == 0)."""
    t = max((min(pref, dim) // 128) * 128, 128)
    while dim % t:
        t -= 128
    return max(t, 128)


# --------------------------------------------------------------------------
# Fused whole-MLP kernel: weights resident in VMEM, activations never leave
# the chip.  refs = (w0, b0, w1, b1, ..., out_ref).
# --------------------------------------------------------------------------
def _mlp_fused_kernel(x_ref, *refs, n_layers):
    o_ref = refs[-1]
    wb = refs[:-1]

    h = x_ref[...]                                     # compute dtype (f32/bf16)
    for li in range(n_layers):
        w = wb[2 * li][...]
        b = wb[2 * li + 1][...]                        # (1, D) f32 bias
        y = jnp.dot(h, w, preferred_element_type=jnp.float32)
        y = y + b.astype(jnp.float32)                  # bias add in f32
        if li < n_layers - 1:
            h = jnp.tanh(y).astype(w.dtype)            # tanh in f32, store in
        else:                                          # compute dtype for MXU
            o_ref[...] = y.astype(o_ref.dtype)


# --------------------------------------------------------------------------
# Streaming fallback: single layer, grid (M, N, K), f32 accumulator scratch,
# bias + optional tanh fused into the last-K epilogue.
# --------------------------------------------------------------------------
def _linear_act_kernel(x_ref, w_ref, b_ref, o_ref, acc_ref, *, apply_act):
    k = pl.program_id(2)

    @pl.when(k == 0)
    def _():
        acc_ref[...] = jnp.zeros_like(acc_ref)

    acc_ref[...] += jnp.dot(x_ref[...], w_ref[...],
                            preferred_element_type=jnp.float32)

    @pl.when(k == pl.num_programs(2) - 1)
    def _():
        y = acc_ref[...] + b_ref[...].astype(jnp.float32)
        if apply_act:
            y = jnp.tanh(y)
        o_ref[...] = y.astype(o_ref.dtype)


def _linear_act_streamed(x_p, w_p, b_p, *, apply_act, out_dtype, tm, tn, tk,
                         vmem_limit):
    Bp, Kp = x_p.shape
    _, Np = w_p.shape
    out_item = jnp.dtype(out_dtype).itemsize
    cost = pl.CostEstimate(
        flops=2 * Bp * Kp * Np,
        transcendentals=Bp * Np if apply_act else 0,
        bytes_accessed=(x_p.size * x_p.dtype.itemsize
                        + w_p.size * w_p.dtype.itemsize
                        + b_p.size * b_p.dtype.itemsize
                        + Bp * Np * out_item),
    )
    return pl.pallas_call(
        functools.partial(_linear_act_kernel, apply_act=apply_act),
        out_shape=jax.ShapeDtypeStruct((Bp, Np), out_dtype),
        grid=(Bp // tm, Np // tn, Kp // tk),
        in_specs=[
            pl.BlockSpec((tm, tk), lambda i, j, k: (i, k)),
            pl.BlockSpec((tk, tn), lambda i, j, k: (k, j)),
            pl.BlockSpec((1, tn), lambda i, j, k: (0, j)),
        ],
        out_specs=pl.BlockSpec((tm, tn), lambda i, j, k: (i, j)),
        scratch_shapes=[pltpu.VMEM((tm, tn), jnp.float32)],
        compiler_params=pltpu.CompilerParams(
            dimension_semantics=("parallel", "parallel", "arbitrary"),
            vmem_limit_bytes=vmem_limit),
        cost_estimate=cost,
    )(x_p, w_p, b_p)


# --------------------------------------------------------------------------
# Wrapper
# --------------------------------------------------------------------------
def mlp_forward(x, params, *, tile_m=512, compute_dtype=None,
                force_streaming=False):
    """MLP forward matching MLP.forward (tanh on all layers but the last).

    params: list of (W, b) with W shaped (in, out) -- transpose of nn.Linear.
    compute_dtype: storage/MXU dtype for x, weights and intermediate
      activations (e.g. jnp.bfloat16).  Accumulation, bias add and tanh are
      always f32.  Default: x.dtype.
    """
    orig_shape = x.shape
    if x.ndim != 2:
        x = x.reshape(-1, orig_shape[-1])
    B, Din = x.shape
    n_layers = len(params)
    out_dtype = x.dtype
    out_item = jnp.dtype(out_dtype).itemsize
    cdt = jnp.dtype(compute_dtype) if compute_dtype is not None else jnp.dtype(x.dtype)
    act_item = cdt.itemsize

    # Lane-dense padded feature dims (multiples of 128; do NOT pad to 256).
    Din_p = _round_up(Din, 128)
    out_dims = [w.shape[1] for (w, _) in params]
    out_dims_p = [_round_up(d, 128) for d in out_dims]
    Dout, Dout_p = out_dims[-1], out_dims_p[-1]
    max_width = max([Din_p] + out_dims_p)

    # Padded parameters.  Zero padding is exact: padded weight cols / bias
    # entries are 0 -> padded activation cols are tanh(0)=0 and the matching
    # padded weight rows of the next layer are 0; padded batch rows are
    # independent and sliced off at the end.
    padded = []
    in_p = Din_p
    for (w, b), d_p in zip(params, out_dims_p):
        fi, fo = w.shape
        w_p = jnp.pad(w.astype(cdt), ((0, in_p - fi), (0, d_p - fo)))
        b_p = jnp.pad(b.astype(jnp.float32).reshape(1, fo),
                      ((0, 0), (0, d_p - fo)))
        padded.append((w_p, b_p))
        in_p = d_p

    param_bytes = sum(w.size * w.dtype.itemsize + b.size * b.dtype.itemsize
                      for (w, b) in padded)
    vmem_cap = _vmem_capacity_bytes()
    budget = int(0.70 * vmem_cap)          # leave room for pipeline buffers

    # --- batch tile selection -------------------------------------------
    sub = 16 if act_item < 4 else 8        # sublane granule (bf16 needs 16)
    # Balanced tiles (minimise zero-row padding), >=2 grid steps when the
    # batch allows it so v7x can shard the grid across its two TensorCores.
    n_tiles = max(_cdiv(B, tile_m), 2 if B > sub else 1)
    tm = _round_up(_cdiv(B, n_tiles), sub)

    def _tile_bytes(tm_):
        return (2 * tm_ * Din_p * act_item          # double-buffered x tile
                + 2 * tm_ * Dout_p * out_item       # double-buffered out tile
                + 2 * tm_ * max_width * 4)          # f32 intermediates

    # Shrink the batch tile if activations + resident weights overflow VMEM.
    while tm > sub and param_bytes + _tile_bytes(tm) > budget:
        tm = _round_up(tm // 2, sub)

    B_p = _round_up(B, tm)
    n_tiles = B_p // tm
    x_p = jnp.pad(x.astype(cdt), ((0, B_p - B), (0, Din_p - Din)))

    use_fused = (not force_streaming) and \
        (param_bytes + _tile_bytes(tm) <= budget)

    def _limit(need):
        hi = min(max(int(0.9 * vmem_cap), 48 * _MIB), 100 * _MIB)
        return int(min(max(int(1.3 * need), 32 * _MIB), hi))

    if use_fused:
        # ---- fused path: all weights resident, single pallas_call --------
        flat = []
        in_specs = [pl.BlockSpec((tm, Din_p), lambda i: (i, 0))]
        for (w_p, b_p) in padded:
            for arr in (w_p, b_p):
                flat.append(arr)
                # Constant (0, 0) block -> resident in VMEM across all grid
                # steps; Buffered(1) drops the pointless double buffer.
                try:
                    spec = pl.BlockSpec(arr.shape, lambda i: (0, 0),
                                        pipeline_mode=pl.Buffered(1))
                except TypeError:  # older BlockSpec without pipeline_mode
                    spec = pl.BlockSpec(arr.shape, lambda i: (0, 0))
                in_specs.append(spec)

        flops = 2 * B_p * sum(w.shape[0] * w.shape[1] for (w, _) in padded)
        transc = B_p * sum(out_dims_p[:-1])
        bytes_acc = (param_bytes + x_p.size * act_item
                     + B_p * Dout_p * out_item)

        out_p = pl.pallas_call(
            functools.partial(_mlp_fused_kernel, n_layers=n_layers),
            out_shape=jax.ShapeDtypeStruct((B_p, Dout_p), out_dtype),
            grid=(n_tiles,),
            in_specs=in_specs,
            out_specs=pl.BlockSpec((tm, Dout_p), lambda i: (i, 0)),
            compiler_params=pltpu.CompilerParams(
                dimension_semantics=("parallel",),
                vmem_limit_bytes=_limit(param_bytes + _tile_bytes(tm))),
            cost_estimate=pl.CostEstimate(flops=flops,
                                          transcendentals=transc,
                                          bytes_accessed=bytes_acc),
        )(x_p, *flat)
    else:
        # ---- streaming fallback (weights too big to keep resident) -------
        h = x_p
        in_w = Din_p
        for li, ((w_p, b_p), d_p) in enumerate(zip(padded, out_dims_p)):
            last = (li == n_layers - 1)
            tk = _pick_tile(in_w, 512)
            tn = _pick_tile(d_p, 512)
            o_item = out_item if last else act_item
            need = (2 * tm * tk * act_item + 2 * tk * tn * act_item
                    + 2 * tn * 4 + 2 * tm * tn * o_item + tm * tn * 4)
            h = _linear_act_streamed(
                h, w_p, b_p, apply_act=not last,
                out_dtype=(out_dtype if last else cdt),
                tm=tm, tn=tn, tk=tk, vmem_limit=_limit(need))
            in_w = d_p
        out_p = h

    out = out_p[:B, :Dout]
    if len(orig_shape) != 2:
        out = out.reshape(orig_shape[:-1] + (Dout,))
    return out


# --------------------------------------------------------------------------
# Reference / init helpers
# --------------------------------------------------------------------------
def init_mlp_params(key, in_features, out_features, num_layers, num_neurons,
                    dtype=jnp.float32):
    """Parameter shapes matching the PyTorch module (W stored transposed)."""
    dims = [in_features] + [num_neurons] * num_layers + [out_features]
    params = []
    for li in range(len(dims) - 1):
        fan_in, fan_out = dims[li], dims[li + 1]
        key, kw, kb = jax.random.split(key, 3)
        bound = 1.0 / jnp.sqrt(jnp.array(fan_in, dtype))
        w = jax.random.uniform(kw, (fan_in, fan_out), dtype,
                               minval=-bound, maxval=bound)
        b = jax.random.uniform(kb, (fan_out,), dtype,
                               minval=-bound, maxval=bound)
        params.append((w, b))
    return params


def mlp_reference(x, params):
    n = len(params)
    h = x
    for li, (w, b) in enumerate(params):
        h = h @ w + b
        if li < n - 1:
            h = jnp.tanh(h)
    return h


if __name__ == "__main__":
    # Small shapes consistent with the module.
    batch = 8
    in_features = 16
    out_features = 4
    num_layers = 3          # -> input layer + 2 hidden layers + output layer
    num_neurons = 32

    key = jax.random.PRNGKey(0)
    key, kx = jax.random.split(key)
    x = jax.random.normal(kx, (batch, in_features), dtype=jnp.float32)
    params = init_mlp_params(key, in_features, out_features,
                             num_layers, num_neurons)

    ref = mlp_reference(x, params)

    # 1) fused, f32 path (default).
    fwd = jax.jit(mlp_forward)
    out = jax.block_until_ready(fwd(x, params))
    assert out.shape == (batch, out_features)
    assert jnp.allclose(out, ref, atol=1e-5, rtol=1e-5)

    # 2) fused, bf16 storage + f32 accumulation (precision change expected).
    fwd_bf16 = jax.jit(functools.partial(mlp_forward,
                                         compute_dtype=jnp.bfloat16))
    out_bf16 = jax.block_until_ready(fwd_bf16(x, params))
    assert jnp.allclose(out_bf16, ref, atol=5e-2, rtol=5e-2)

    # 3) streaming fallback path (what a too-big-for-VMEM model takes on v7x).
    fwd_stream = jax.jit(functools.partial(mlp_forward, force_streaming=True))
    out_stream = jax.block_until_ready(fwd_stream(x, params))
    assert jnp.allclose(out_stream, ref, atol=1e-5, rtol=1e-5)

    print("KERNEL_OK")
</pallas_src>

<mosaic_0001>
module attributes {stable_mosaic.version = 11 : i64} {
  func.func @_mlp_fused_kernel(%arg0: i32, %arg1: memref<8x128xf32, #tpu.memory_space<vmem>>, %arg2: memref<128x128xf32, #tpu.memory_space<vmem>>, %arg3: memref<1x128xf32, #tpu.memory_space<vmem>>, %arg4: memref<128x128xf32, #tpu.memory_space<vmem>>, %arg5: memref<1x128xf32, #tpu.memory_space<vmem>>, %arg6: memref<128x128xf32, #tpu.memory_space<vmem>>, %arg7: memref<1x128xf32, #tpu.memory_space<vmem>>, %arg8: memref<128x128xf32, #tpu.memory_space<vmem>>, %arg9: memref<1x128xf32, #tpu.memory_space<vmem>>, %arg10: memref<8x128xf32, #tpu.memory_space<vmem>>) attributes {dimension_semantics = [#tpu.dimension_semantics<parallel>], iteration_bounds = array<i64: 1>, scalar_prefetch = 0 : i64, scratch_operands = 0 : i64, tpu.core_type = #tpu.core_type<tc>, window_params = [{transform_indices = @transform_0, window_bounds = array<i64: 8, 128>}, {pipeline_mode = #tpu.pipeline_mode<synchronous>, transform_indices = @transform_1, window_bounds = array<i64: 128, 128>}, {pipeline_mode = #tpu.pipeline_mode<synchronous>, transform_indices = @transform_2, window_bounds = array<i64: 1, 128>}, {pipeline_mode = #tpu.pipeline_mode<synchronous>, transform_indices = @transform_3, window_bounds = array<i64: 128, 128>}, {pipeline_mode = #tpu.pipeline_mode<synchronous>, transform_indices = @transform_4, window_bounds = array<i64: 1, 128>}, {pipeline_mode = #tpu.pipeline_mode<synchronous>, transform_indices = @transform_5, window_bounds = array<i64: 128, 128>}, {pipeline_mode = #tpu.pipeline_mode<synchronous>, transform_indices = @transform_6, window_bounds = array<i64: 1, 128>}, {pipeline_mode = #tpu.pipeline_mode<synchronous>, transform_indices = @transform_7, window_bounds = array<i64: 128, 128>}, {pipeline_mode = #tpu.pipeline_mode<synchronous>, transform_indices = @transform_8, window_bounds = array<i64: 1, 128>}, {transform_indices = @transform_9, window_bounds = array<i64: 8, 128>}]} {
    %c0 = arith.constant 0 : index
    %c0_0 = arith.constant 0 : index
    %0 = vector.load %arg1[%c0, %c0_0] : memref<8x128xf32, #tpu.memory_space<vmem>>, vector<8x128xf32>
    %c0_1 = arith.constant 0 : index
    %c0_2 = arith.constant 0 : index
    %1 = vector.load %arg2[%c0_1, %c0_2] : memref<128x128xf32, #tpu.memory_space<vmem>>, vector<128x128xf32>
    %c0_3 = arith.constant 0 : index
    %c0_4 = arith.constant 0 : index
    %2 = vector.load %arg3[%c0_3, %c0_4] : memref<1x128xf32, #tpu.memory_space<vmem>>, vector<1x128xf32>
    %cst = arith.constant dense<0.000000e+00> : vector<8x128xf32>
    %3 = tpu.matmul %0, %1, %cst {dimension_numbers = #tpu.dot_dimension_numbers<[1], [0], [0], [1], [0, 0, 1, 1], [], []>} : vector<8x128xf32>, vector<128x128xf32>, vector<8x128xf32> -> vector<8x128xf32>
    %4 = vector.broadcast %2 : vector<1x128xf32> to vector<8x128xf32>
    %5 = arith.addf %3, %4 : vector<8x128xf32>
    %6 = math.tanh %5 : vector<8x128xf32>
    %c0_5 = arith.constant 0 : index
    %c0_6 = arith.constant 0 : index
    %7 = vector.load %arg4[%c0_5, %c0_6] : memref<128x128xf32, #tpu.memory_space<vmem>>, vector<128x128xf32>
    %c0_7 = arith.constant 0 : index
    %c0_8 = arith.constant 0 : index
    %8 = vector.load %arg5[%c0_7, %c0_8] : memref<1x128xf32, #tpu.memory_space<vmem>>, vector<1x128xf32>
    %cst_9 = arith.constant dense<0.000000e+00> : vector<8x128xf32>
    %9 = tpu.matmul %6, %7, %cst_9 {dimension_numbers = #tpu.dot_dimension_numbers<[1], [0], [0], [1], [0, 0, 1, 1], [], []>} : vector<8x128xf32>, vector<128x128xf32>, vector<8x128xf32> -> vector<8x128xf32>
    %10 = vector.broadcast %8 : vector<1x128xf32> to vector<8x128xf32>
    %11 = arith.addf %9, %10 : vector<8x128xf32>
    %12 = math.tanh %11 : vector<8x128xf32>
    %c0_10 = arith.constant 0 : index
    %c0_11 = arith.constant 0 : index
    %13 = vector.load %arg6[%c0_10, %c0_11] : memref<128x128xf32, #tpu.memory_space<vmem>>, vector<128x128xf32>
    %c0_12 = arith.constant 0 : index
    %c0_13 = arith.constant 0 : index
    %14 = vector.load %arg7[%c0_12, %c0_13] : memref<1x128xf32, #tpu.memory_space<vmem>>, vector<1x128xf32>
    %cst_14 = arith.constant dense<0.000000e+00> : vector<8x128xf32>
    %15 = tpu.matmul %12, %13, %cst_14 {dimension_numbers = #tpu.dot_dimension_numbers<[1], [0], [0], [1], [0, 0, 1, 1], [], []>} : vector<8x128xf32>, vector<128x128xf32>, vector<8x128xf32> -> vector<8x128xf32>
    %16 = vector.broadcast %14 : vector<1x128xf32> to vector<8x128xf32>
    %17 = arith.addf %15, %16 : vector<8x128xf32>
    %18 = math.tanh %17 : vector<8x128xf32>
    %c0_15 = arith.constant 0 : index
    %c0_16 = arith.constant 0 : index
    %19 = vector.load %arg8[%c0_15, %c0_16] : memref<128x128xf32, #tpu.memory_space<vmem>>, vector<128x128xf32>
    %c0_17 = arith.constant 0 : index
    %c0_18 = arith.constant 0 : index
    %20 = vector.load %arg9[%c0_17, %c0_18] : memref<1x128xf32, #tpu.memory_space<vmem>>, vector<1x128xf32>
    %cst_19 = arith.constant dense<0.000000e+00> : vector<8x128xf32>
    %21 = tpu.matmul %18, %19, %cst_19 {dimension_numbers = #tpu.dot_dimension_numbers<[1], [0], [0], [1], [0, 0, 1, 1], [], []>} : vector<8x128xf32>, vector<128x128xf32>, vector<8x128xf32> -> vector<8x128xf32>
    %22 = vector.broadcast %20 : vector<1x128xf32> to vector<8x128xf32>
    %23 = arith.addf %21, %22 : vector<8x128xf32>
    %c0_20 = arith.constant 0 : index
    %c0_21 = arith.constant 0 : index
    %24 = vector.load %arg10[%c0_20, %c0_21] : memref<8x128xf32, #tpu.memory_space<vmem>>, vector<8x128xf32>
    tpu.vector_store %arg10[%c0_20, %c0_21], %23 {strides = array<i32>} : memref<8x128xf32, #tpu.memory_space<vmem>>, vector<8x128xf32>,
    return
  }
  func.func @transform_0(%arg0: i32) -> (i32, i32) {
    %c0_i32 = arith.constant 0 : i32
    %c0_i32_0 = arith.constant 0 : i32
    return %arg0, %c0_i32 : i32, i32
  }
  func.func @transform_1(%arg0: i32) -> (i32, i32) {
    %c0_i32 = arith.constant 0 : i32
    %c0_i32_0 = arith.constant 0 : i32
    %c0_i32_1 = arith.constant 0 : i32
    return %c0_i32, %c0_i32_0 : i32, i32
  }
  func.func @transform_2(%arg0: i32) -> (i32, i32) {
    %c0_i32 = arith.constant 0 : i32
    %c0_i32_0 = arith.constant 0 : i32
    %c0_i32_1 = arith.constant 0 : i32
    return %c0_i32, %c0_i32_0 : i32, i32
  }
  func.func @transform_3(%arg0: i32) -> (i32, i32) {
    %c0_i32 = arith.constant 0 : i32
    %c0_i32_0 = arith.constant 0 : i32
    %c0_i32_1 = arith.constant 0 : i32
    return %c0_i32, %c0_i32_0 : i32, i32
  }
  func.func @transform_4(%arg0: i32) -> (i32, i32) {
    %c0_i32 = arith.constant 0 : i32
    %c0_i32_0 = arith.constant 0 : i32
    %c0_i32_1 = arith.constant 0 : i32
    return %c0_i32, %c0_i32_0 : i32, i32
  }
  func.func @transform_5(%arg0: i32) -> (i32, i32) {
    %c0_i32 = arith.constant 0 : i32
    %c0_i32_0 = arith.constant 0 : i32
    %c0_i32_1 = arith.constant 0 : i32
    return %c0_i32, %c0_i32_0 : i32, i32
  }
  func.func @transform_6(%arg0: i32) -> (i32, i32) {
    %c0_i32 = arith.constant 0 : i32
    %c0_i32_0 = arith.constant 0 : i32
    %c0_i32_1 = arith.constant 0 : i32
    return %c0_i32, %c0_i32_0 : i32, i32
  }
  func.func @transform_7(%arg0: i32) -> (i32, i32) {
    %c0_i32 = arith.constant 0 : i32
    %c0_i32_0 = arith.constant 0 : i32
    %c0_i32_1 = arith.constant 0 : i32
    return %c0_i32, %c0_i32_0 : i32, i32
  }
  func.func @transform_8(%arg0: i32) -> (i32, i32) {
    %c0_i32 = arith.constant 0 : i32
    %c0_i32_0 = arith.constant 0 : i32
    %c0_i32_1 = arith.constant 0 : i32
    return %c0_i32, %c0_i32_0 : i32, i32
  }
  func.func @transform_9(%arg0: i32) -> (i32, i32) {
    %c0_i32 = arith.constant 0 : i32
    %c0_i32_0 = arith.constant 0 : i32
    return %arg0, %c0_i32 : i32, i32
  }
}

</mosaic_0001>

<llo_original>
// kernel: mlp_forward.1
$region0: #{mlp_forward.1}
  #allocation0 [shape = 'u32[]', space=smem, size = 0x4, offset = 0x4, fixed_abs, tag = 'smem constant byte address 0x4 - core index']
  #allocation1 [shape = 'u32[144,128]{1,0:T(1,128)}', space=vmem, size = 0x12000, scoped, tag = 'internal scratch']
  %s0 = inlined_call_operand.vmem [shape: f32[8,128], index: 0, kind: input, shape index: {}]
  %s1 = inlined_call_operand.vmem [shape: f32[128,128], index: 1, kind: input, shape index: {}]
  %s2 = inlined_call_operand.vmem [shape: f32[1,128], index: 2, kind: input, shape index: {}]
  %s3 = inlined_call_operand.vmem [shape: f32[128,128], index: 3, kind: input, shape index: {}]
  %s4 = inlined_call_operand.vmem [shape: f32[1,128], index: 4, kind: input, shape index: {}]
  %s5 = inlined_call_operand.vmem [shape: f32[128,128], index: 5, kind: input, shape index: {}]
  %s6 = inlined_call_operand.vmem [shape: f32[1,128], index: 6, kind: input, shape index: {}]
  %s7 = inlined_call_operand.vmem [shape: f32[128,128], index: 7, kind: input, shape index: {}]
  %s8 = inlined_call_operand.vmem [shape: f32[1,128], index: 8, kind: input, shape index: {}]
  %s9 = inlined_call_operand.vmem [shape: f32[8,128], index: 9, kind: output, shape index: {}]
  %s10 = sld [smem:[#allocation0]]
  $region46: #{mlp_forward.1} parent=0
    _
  %s12 = ssub.s32 1, %s10
  %s13 = scalar_select 0, %s12, %s10
  // Predicated region
  $region2: #{mlp_forward.1} parent=0 // pred_check
    _
  $region3: #{mlp_forward.1} parent=0 // pred_check_branch
    %15 = sbr.rel (0) target = $region5
  $region4: #{mlp_forward.1} parent=0 // pred_region
    _
  $region5: #{mlp_forward.1} parent=0 // pred_fallthru
    _
  // Predicated region
  $region6: #{mlp_forward.1} parent=0 // pred_check
    _
  $region7: #{mlp_forward.1} parent=0 // pred_check_branch
    %17 = sbr.rel (0) target = $region9
  $region8: #{mlp_forward.1} parent=0 // pred_region
    _
  $region9: #{mlp_forward.1} parent=0 // pred_fallthru
    _
  // Predicated region
  $region10: #{mlp_forward.1} parent=0 // pred_check
    _
  $region11: #{mlp_forward.1} parent=0 // pred_check_branch
    %19 = sbr.rel (0) target = $region13
  $region12: #{mlp_forward.1} parent=0 // pred_region
    _
  $region13: #{mlp_forward.1} parent=0 // pred_fallthru
    _
  // Predicated region
  $region14: #{mlp_forward.1} parent=0 // pred_check
    _
  $region15: #{mlp_forward.1} parent=0 // pred_check_branch
    %21 = sbr.rel (0) target = $region17
  $region16: #{mlp_forward.1} parent=0 // pred_region
    _
  $region17: #{mlp_forward.1} parent=0 // pred_fallthru
    _
  // Predicated region
  $region18: #{mlp_forward.1} parent=0 // pred_check
    _
  $region19: #{mlp_forward.1} parent=0 // pred_check_branch
    %23 = sbr.rel (0) target = $region21
  $region20: #{mlp_forward.1} parent=0 // pred_region
    _
  $region21: #{mlp_forward.1} parent=0 // pred_fallthru
    _
  // Predicated region
  $region22: #{mlp_forward.1} parent=0 // pred_check
    _
  $region23: #{mlp_forward.1} parent=0 // pred_check_branch
    %25 = sbr.rel (0) target = $region25
  $region24: #{mlp_forward.1} parent=0 // pred_region
    _
  $region25: #{mlp_forward.1} parent=0 // pred_fallthru
    _
  // Predicated region
  $region26: #{mlp_forward.1} parent=0 // pred_check
    _
  $region27: #{mlp_forward.1} parent=0 // pred_check_branch
    %27 = sbr.rel (0) target = $region29
  $region28: #{mlp_forward.1} parent=0 // pred_region
    _
  $region29: #{mlp_forward.1} parent=0 // pred_fallthru
    _
  // Predicated region
  $region30: #{mlp_forward.1} parent=0 // pred_check
    _
  $region31: #{mlp_forward.1} parent=0 // pred_check_branch
    %29 = sbr.rel (0) target = $region33
  $region32: #{mlp_forward.1} parent=0 // pred_region
    _
  $region33: #{mlp_forward.1} parent=0 // pred_fallthru
    _
  // Predicated region
  $region34: #{mlp_forward.1} parent=0 // pred_check
    _
  $region35: #{mlp_forward.1} parent=0 // pred_check_branch
    %31 = sbr.rel (0) target = $region37
  $region36: #{mlp_forward.1} parent=0 // pred_region
    _
  $region37: #{mlp_forward.1} parent=0 // pred_fallthru
    _
  %v32 = vld [vmem:[%s0] sm:$0xff]
  %v33 = vld [vmem:[%s1] sm:$0xff]
  %v34 = vld [vmem:[%s1 + $0x8] sm:$0xff]
  %v35 = vld [vmem:[%s1 + $0x10] sm:$0xff]
  %v36 = vld [vmem:[%s1 + $0x18] sm:$0xff]
  %v37 = vld [vmem:[%s1 + $0x20] sm:$0xff]
  %v38 = vld [vmem:[%s1 + $0x28] sm:$0xff]
  %v39 = vld [vmem:[%s1 + $0x30] sm:$0xff]
  %v40 = vld [vmem:[%s1 + $0x38] sm:$0xff]
  %v41 = vld [vmem:[%s1 + $0x40] sm:$0xff]
  %v42 = vld [vmem:[%s1 + $0x48] sm:$0xff]
  %v43 = vld [vmem:[%s1 + $0x50] sm:$0xff]
  %v44 = vld [vmem:[%s1 + $0x58] sm:$0xff]
  %v45 = vld [vmem:[%s1 + $0x60] sm:$0xff]
  %v46 = vld [vmem:[%s1 + $0x68] sm:$0xff]
  %v47 = vld [vmem:[%s1 + $0x70] sm:$0xff]
  %v48 = vld [vmem:[%s1 + $0x78] sm:$0xff]
  %v49 = vld [vmem:[%s2] sm:$0x1]
  %v51 = vlaneseq
  %v52 = vshrl.u32 %v51, 7
  %v53 = vsub.s32 0, %v52
  %v54 = vrot.slane %v49, %v53
  %56 = vmatprep.subr.mxu0 0.0
  %57 = vmatpush1.msra.mxu0 %v48
  %58 = vmatprep.subr.mxu0 0.0
  %59 = vmatpush1.msra.mxu0 %v47
  %60 = vmatprep.subr.mxu0 0.0
  %61 = vmatpush1.msra.mxu0 %v46
  %62 = vmatprep.subr.mxu0 0.0
  %63 = vmatpush1.msra.mxu0 %v45
  %64 = vmatprep.subr.mxu0 0.0
  %65 = vmatpush1.msra.mxu0 %v44
  %66 = vmatprep.subr.mxu0 0.0
  %67 = vmatpush1.msra.mxu0 %v43
  %68 = vmatprep.subr.mxu0 0.0
  %69 = vmatpush1.msra.mxu0 %v42
  %70 = vmatprep.subr.mxu0 0.0
  %71 = vmatpush1.msra.mxu0 %v41
  %72 = vmatprep.subr.mxu0 0.0
  %73 = vmatpush1.msra.mxu0 %v40
  %74 = vmatprep.subr.mxu0 0.0
  %75 = vmatpush1.msra.mxu0 %v39
  %76 = vmatprep.subr.mxu0 0.0
  %77 = vmatpush1.msra.mxu0 %v38
  %78 = vmatprep.subr.mxu0 0.0
  %79 = vmatpush1.msra.mxu0 %v37
  %80 = vmatprep.subr.mxu0 0.0
  %81 = vmatpush1.msra.mxu0 %v36
  %82 = vmatprep.subr.mxu0 0.0
  %83 = vmatpush1.msra.mxu0 %v35
  %84 = vmatprep.subr.mxu0 0.0
  %85 = vmatpush1.msra.mxu0 %v34
  %86 = vmatprep.subr.mxu0 0.0
  %87 = vmatpush1.msra.mxu0 %v33
  %88 = vmatprep.subr.mxu0 0.0
  %89 = vmatpush2.msra.mxu0 0.0
  %90 = vmatprep.subr.mxu0 0.0
  %91 = vmatpush2.msra.mxu0 0.0
  %92 = vmatprep.subr.mxu0 0.0
  %93 = vmatpush2.msra.mxu0 0.0
  %94 = vmatprep.subr.mxu0 0.0
  %95 = vmatpush2.msra.mxu0 0.0
  %96 = vmatprep.subr.mxu0 0.0
  %97 = vmatpush2.msra.mxu0 0.0
  %98 = vmatprep.subr.mxu0 0.0
  %99 = vmatpush2.msra.mxu0 0.0
  %100 = vmatprep.subr.mxu0 0.0
  %101 = vmatpush2.msra.mxu0 0.0
  %102 = vmatprep.subr.mxu0 0.0
  %103 = vmatpush2.msra.mxu0 0.0
  %104 = vmatprep.subr.mxu0 0.0
  %105 = vmatpush2.msra.mxu0 0.0
  %106 = vmatprep.subr.mxu0 0.0
  %107 = vmatpush2.msra.mxu0 0.0
  %108 = vmatprep.subr.mxu0 0.0
  %109 = vmatpush2.msra.mxu0 0.0
  %110 = vmatprep.subr.mxu0 0.0
  %111 = vmatpush2.msra.mxu0 0.0
  %112 = vmatprep.subr.mxu0 0.0
  %113 = vmatpush2.msra.mxu0 0.0
  %114 = vmatprep.subr.mxu0 0.0
  %115 = vmatpush2.msra.mxu0 0.0
  %116 = vmatprep.subr.mxu0 0.0
  %117 = vmatpush2.msra.mxu0 0.0
  %118 = vmatprep.subr.mxu0 0.0
  %119 = vmatpush2.msra.mxu0 0.0
  %120 = vmatprep.mubr.f32.mxu0 0.0
  %121 = vmatmul.mubr.f32.gmra.mxu0 %v32
  %v122 = vpop.f32.mrf.mxu0
  %v123 = vadd.f32 %v54, %v122
  %v124 = vpop.f32.mrf.mxu0
  %125 = vdwg.mxu0
  %v126 = vtanh.pop %v123
  %v127 = vld [vmem:[%s3] sm:$0xff]
  %v128 = vld [vmem:[%s3 + $0x8] sm:$0xff]
  %v129 = vld [vmem:[%s3 + $0x10] sm:$0xff]
  %v130 = vld [vmem:[%s3 + $0x18] sm:$0xff]
  %v131 = vld [vmem:[%s3 + $0x20] sm:$0xff]
  %v132 = vld [vmem:[%s3 + $0x28] sm:$0xff]
  %v133 = vld [vmem:[%s3 + $0x30] sm:$0xff]
  %v134 = vld [vmem:[%s3 + $0x38] sm:$0xff]
  %v135 = vld [vmem:[%s3 + $0x40] sm:$0xff]
  %v136 = vld [vmem:[%s3 + $0x48] sm:$0xff]
  %v137 = vld [vmem:[%s3 + $0x50] sm:$0xff]
  %v138 = vld [vmem:[%s3 + $0x58] sm:$0xff]
  %v139 = vld [vmem:[%s3 + $0x60] sm:$0xff]
  %v140 = vld [vmem:[%s3 + $0x68] sm:$0xff]
  %v141 = vld [vmem:[%s3 + $0x70] sm:$0xff]
  %v142 = vld [vmem:[%s3 + $0x78] sm:$0xff]
  %v143 = vld [vmem:[%s4] sm:$0x1]
  %v145 = vlaneseq
  %v146 = vshrl.u32 %v145, 7
  %v147 = vsub.s32 0, %v146
  %v148 = vrot.slane %v143, %v147
  %150 = vmatprep.subr.mxu0 0.0
  %151 = vmatpush1.msra.mxu0 %v142
  %152 = vmatprep.subr.mxu0 0.0
  %153 = vmatpush1.msra.mxu0 %v141
  %154 = vmatprep.subr.mxu0 0.0
  %155 = vmatpush1.msra.mxu0 %v140
  %156 = vmatprep.subr.mxu0 0.0
  %157 = vmatpush1.msra.mxu0 %v139
  %158 = vmatprep.subr.mxu0 0.0
  %159 = vmatpush1.msra.mxu0 %v138
  %160 = vmatprep.subr.mxu0 0.0
  %161 = vmatpush1.msra.mxu0 %v137
  %162 = vmatprep.subr.mxu0 0.0
  %163 = vmatpush1.msra.mxu0 %v136
  %164 = vmatprep.subr.mxu0 0.0
  %165 = vmatpush1.msra.mxu0 %v135
  %166 = vmatprep.subr.mxu0 0.0
  %167 = vmatpush1.msra.mxu0 %v134
  %168 = vmatprep.subr.mxu0 0.0
  %169 = vmatpush1.msra.mxu0 %v133
  %170 = vmatprep.subr.mxu0 0.0
  %171 = vmatpush1.msra.mxu0 %v132
  %172 = vmatprep.subr.mxu0 0.0
  %173 = vmatpush1.msra.mxu0 %v131
  %174 = vmatprep.subr.mxu0 0.0
  %175 = vmatpush1.msra.mxu0 %v130
  %176 = vmatprep.subr.mxu0 0.0
  %177 = vmatpush1.msra.mxu0 %v129
  %178 = vmatprep.subr.mxu0 0.0
  %179 = vmatpush1.msra.mxu0 %v128
  %180 = vmatprep.subr.mxu0 0.0
  %181 = vmatpush1.msra.mxu0 %v127
  %182 = vmatprep.subr.mxu0 0.0
  %183 = vmatpush2.msra.mxu0 0.0
  %184 = vmatprep.subr.mxu0 0.0
  %185 = vmatpush2.msra.mxu0 0.0
  %186 = vmatprep.subr.mxu0 0.0
  %187 = vmatpush2.msra.mxu0 0.0
  %188 = vmatprep.subr.mxu0 0.0
  %189 = vmatpush2.msra.mxu0 0.0
  %190 = vmatprep.subr.mxu0 0.0
  %191 = vmatpush2.msra.mxu0 0.0
  %192 = vmatprep.subr.mxu0 0.0
  %193 = vmatpush2.msra.mxu0 0.0
  %194 = vmatprep.subr.mxu0 0.0
  %195 = vmatpush2.msra.mxu0 0.0
  %196 = vmatprep.subr.mxu0 0.0
  %197 = vmatpush2.msra.mxu0 0.0
  %198 = vmatprep.subr.mxu0 0.0
  %199 = vmatpush2.msra.mxu0 0.0
  %200 = vmatprep.subr.mxu0 0.0
  %201 = vmatpush2.msra.mxu0 0.0
  %202 = vmatprep.subr.mxu0 0.0
  %203 = vmatpush2.msra.mxu0 0.0
  %204 = vmatprep.subr.mxu0 0.0
  %205 = vmatpush2.msra.mxu0 0.0
  %206 = vmatprep.subr.mxu0 0.0
  %207 = vmatpush2.msra.mxu0 0.0
  %208 = vmatprep.subr.mxu0 0.0
  %209 = vmatpush2.msra.mxu0 0.0
  %210 = vmatprep.subr.mxu0 0.0
  %211 = vmatpush2.msra.mxu0 0.0
  %212 = vmatprep.subr.mxu0 0.0
  %213 = vmatpush2.msra.mxu0 0.0
  %214 = vmatprep.mubr.f32.mxu0 0.0
  %215 = vmatmul.mubr.f32.gmra.mxu0 %v126
  %v216 = vpop.f32.mrf.mxu0
  %v217 = vadd.f32 %v148, %v216
  %v218 = vpop.f32.mrf.mxu0
  %219 = vdwg.mxu0
  %v220 = vtanh.pop %v217
  %v221 = vld [vmem:[%s5] sm:$0xff]
  %v222 = vld [vmem:[%s5 + $0x8] sm:$0xff]
  %v223 = vld [vmem:[%s5 + $0x10] sm:$0xff]
  %v224 = vld [vmem:[%s5 + $0x18] sm:$0xff]
  %v225 = vld [vmem:[%s5 + $0x20] sm:$0xff]
  %v226 = vld [vmem:[%s5 + $0x28] sm:$0xff]
  %v227 = vld [vmem:[%s5 + $0x30] sm:$0xff]
  %v228 = vld [vmem:[%s5 + $0x38] sm:$0xff]
  %v229 = vld [vmem:[%s5 + $0x40] sm:$0xff]
  %v230 = vld [vmem:[%s5 + $0x48] sm:$0xff]
  %v231 = vld [vmem:[%s5 + $0x50] sm:$0xff]
  %v232 = vld [vmem:[%s5 + $0x58] sm:$0xff]
  %v233 = vld [vmem:[%s5 + $0x60] sm:$0xff]
  %v234 = vld [vmem:[%s5 + $0x68] sm:$0xff]
  %v235 = vld [vmem:[%s5 + $0x70] sm:$0xff]
  %v236 = vld [vmem:[%s5 + $0x78] sm:$0xff]
  %v237 = vld [vmem:[%s6] sm:$0x1]
  %v239 = vlaneseq
  %v240 = vshrl.u32 %v239, 7
  %v241 = vsub.s32 0, %v240
  %v242 = vrot.slane %v237, %v241
  %244 = vmatprep.subr.mxu0 0.0
  %245 = vmatpush1.msra.mxu0 %v236
  %246 = vmatprep.subr.mxu0 0.0
  %247 = vmatpush1.msra.mxu0 %v235
  %248 = vmatprep.subr.mxu0 0.0
  %249 = vmatpush1.msra.mxu0 %v234
  %250 = vmatprep.subr.mxu0 0.0
  %251 = vmatpush1.msra.mxu0 %v233
  %252 = vmatprep.subr.mxu0 0.0
  %253 = vmatpush1.msra.mxu0 %v232
  %254 = vmatprep.subr.mxu0 0.0
  %255 = vmatpush1.msra.mxu0 %v231
  %256 = vmatprep.subr.mxu0 0.0
  %257 = vmatpush1.msra.mxu0 %v230
  %258 = vmatprep.subr.mxu0 0.0
  %259 = vmatpush1.msra.mxu0 %v229
  %260 = vmatprep.subr.mxu0 0.0
  %261 = vmatpush1.msra.mxu0 %v228
  %262 = vmatprep.subr.mxu0 0.0
  %263 = vmatpush1.msra.mxu0 %v227
  %264 = vmatprep.subr.mxu0 0.0
  %265 = vmatpush1.msra.mxu0 %v226
  %266 = vmatprep.subr.mxu0 0.0
  %267 = vmatpush1.msra.mxu0 %v225
  %268 = vmatprep.subr.mxu0 0.0
  %269 = vmatpush1.msra.mxu0 %v224
  %270 = vmatprep.subr.mxu0 0.0
  %271 = vmatpush1.msra.mxu0 %v223
  %272 = vmatprep.subr.mxu0 0.0
  %273 = vmatpush1.msra.mxu0 %v222
  %274 = vmatprep.subr.mxu0 0.0
  %275 = vmatpush1.msra.mxu0 %v221
  %276 = vmatprep.subr.mxu0 0.0
  %277 = vmatpush2.msra.mxu0 0.0
  %278 = vmatprep.subr.mxu0 0.0
  %279 = vmatpush2.msra.mxu0 0.0
  %280 = vmatprep.subr.mxu0 0.0
  %281 = vmatpush2.msra.mxu0 0.0
  %282 = vmatprep.subr.mxu0 0.0
  %283 = vmatpush2.msra.mxu0 0.0
  %284 = vmatprep.subr.mxu0 0.0
  %285 = vmatpush2.msra.mxu0 0.0
  %286 = vmatprep.subr.mxu0 0.0
  %287 = vmatpush2.msra.mxu0 0.0
  %288 = vmatprep.subr.mxu0 0.0
  %289 = vmatpush2.msra.mxu0 0.0
  %290 = vmatprep.subr.mxu0 0.0
  %291 = vmatpush2.msra.mxu0 0.0
  %292 = vmatprep.subr.mxu0 0.0
  %293 = vmatpush2.msra.mxu0 0.0
  %294 = vmatprep.subr.mxu0 0.0
  %295 = vmatpush2.msra.mxu0 0.0
  %296 = vmatprep.subr.mxu0 0.0
  %297 = vmatpush2.msra.mxu0 0.0
  %298 = vmatprep.subr.mxu0 0.0
  %299 = vmatpush2.msra.mxu0 0.0
  %300 = vmatprep.subr.mxu0 0.0
  %301 = vmatpush2.msra.mxu0 0.0
  %302 = vmatprep.subr.mxu0 0.0
  %303 = vmatpush2.msra.mxu0 0.0
  %304 = vmatprep.subr.mxu0 0.0
  %305 = vmatpush2.msra.mxu0 0.0
  %306 = vmatprep.subr.mxu0 0.0
  %307 = vmatpush2.msra.mxu0 0.0
  %308 = vmatprep.mubr.f32.mxu0 0.0
  %309 = vmatmul.mubr.f32.gmra.mxu0 %v220
  %v310 = vpop.f32.mrf.mxu0
  %v311 = vadd.f32 %v242, %v310
  %v312 = vpop.f32.mrf.mxu0
  %313 = vdwg.mxu0
  %v314 = vtanh.pop %v311
  %v315 = vld [vmem:[%s7] sm:$0xff]
  %v316 = vld [vmem:[%s7 + $0x8] sm:$0xff]
  %v317 = vld [vmem:[%s7 + $0x10] sm:$0xff]
  %v318 = vld [vmem:[%s7 + $0x18] sm:$0xff]
  %v319 = vld [vmem:[%s7 + $0x20] sm:$0xff]
  %v320 = vld [vmem:[%s7 + $0x28] sm:$0xff]
  %v321 = vld [vmem:[%s7 + $0x30] sm:$0xff]
  %v322 = vld [vmem:[%s7 + $0x38] sm:$0xff]
  %v323 = vld [vmem:[%s7 + $0x40] sm:$0xff]
  %v324 = vld [vmem:[%s7 + $0x48] sm:$0xff]
  %v325 = vld [vmem:[%s7 + $0x50] sm:$0xff]
  %v326 = vld [vmem:[%s7 + $0x58] sm:$0xff]
  %v327 = vld [vmem:[%s7 + $0x60] sm:$0xff]
  %v328 = vld [vmem:[%s7 + $0x68] sm:$0xff]
  %v329 = vld [vmem:[%s7 + $0x70] sm:$0xff]
  %v330 = vld [vmem:[%s7 + $0x78] sm:$0xff]
  %v331 = vld [vmem:[%s8] sm:$0x1]
  %v333 = vlaneseq
  %v334 = vshrl.u32 %v333, 7
  %v335 = vsub.s32 0, %v334
  %v336 = vrot.slane %v331, %v335
  %338 = vmatprep.subr.mxu0 0.0
  %339 = vmatpush1.msra.mxu0 %v330
  %340 = vmatprep.subr.mxu0 0.0
  %341 = vmatpush1.msra.mxu0 %v329
  %342 = vmatprep.subr.mxu0 0.0
  %343 = vmatpush1.msra.mxu0 %v328
  %344 = vmatprep.subr.mxu0 0.0
  %345 = vmatpush1.msra.mxu0 %v327
  %346 = vmatprep.subr.mxu0 0.0
  %347 = vmatpush1.msra.mxu0 %v326
  %348 = vmatprep.subr.mxu0 0.0
  %349 = vmatpush1.msra.mxu0 %v325
  %350 = vmatprep.subr.mxu0 0.0
  %351 = vmatpush1.msra.mxu0 %v324
  %352 = vmatprep.subr.mxu0 0.0
  %353 = vmatpush1.msra.mxu0 %v323
  %354 = vmatprep.subr.mxu0 0.0
  %355 = vmatpush1.msra.mxu0 %v322
  %356 = vmatprep.subr.mxu0 0.0
  %357 = vmatpush1.msra.mxu0 %v321
  %358 = vmatprep.subr.mxu0 0.0
  %359 = vmatpush1.msra.mxu0 %v320
  %360 = vmatprep.subr.mxu0 0.0
  %361 = vmatpush1.msra.mxu0 %v319
  %362 = vmatprep.subr.mxu0 0.0
  %363 = vmatpush1.msra.mxu0 %v318
  %364 = vmatprep.subr.mxu0 0.0
  %365 = vmatpush1.msra.mxu0 %v317
  %366 = vmatprep.subr.mxu0 0.0
  %367 = vmatpush1.msra.mxu0 %v316
  %368 = vmatprep.subr.mxu0 0.0
  %369 = vmatpush1.msra.mxu0 %v315
  %370 = vmatprep.subr.mxu0 0.0
  %371 = vmatpush2.msra.mxu0 0.0
  %372 = vmatprep.subr.mxu0 0.0
  %373 = vmatpush2.msra.mxu0 0.0
  %374 = vmatprep.subr.mxu0 0.0
  %375 = vmatpush2.msra.mxu0 0.0
  %376 = vmatprep.subr.mxu0 0.0
  %377 = vmatpush2.msra.mxu0 0.0
  %378 = vmatprep.subr.mxu0 0.0
  %379 = vmatpush2.msra.mxu0 0.0
  %380 = vmatprep.subr.mxu0 0.0
  %381 = vmatpush2.msra.mxu0 0.0
  %382 = vmatprep.subr.mxu0 0.0
  %383 = vmatpush2.msra.mxu0 0.0
  %384 = vmatprep.subr.mxu0 0.0
  %385 = vmatpush2.msra.mxu0 0.0
  %386 = vmatprep.subr.mxu0 0.0
  %387 = vmatpush2.msra.mxu0 0.0
  %388 = vmatprep.subr.mxu0 0.0
  %389 = vmatpush2.msra.mxu0 0.0
  %390 = vmatprep.subr.mxu0 0.0
  %391 = vmatpush2.msra.mxu0 0.0
  %392 = vmatprep.subr.mxu0 0.0
  %393 = vmatpush2.msra.mxu0 0.0
  %394 = vmatprep.subr.mxu0 0.0
  %395 = vmatpush2.msra.mxu0 0.0
  %396 = vmatprep.subr.mxu0 0.0
  %397 = vmatpush2.msra.mxu0 0.0
  %398 = vmatprep.subr.mxu0 0.0
  %399 = vmatpush2.msra.mxu0 0.0
  %400 = vmatprep.subr.mxu0 0.0
  %401 = vmatpush2.msra.mxu0 0.0
  %402 = vmatprep.mubr.f32.mxu0 0.0
  %403 = vmatmul.mubr.f32.gmra.mxu0 %v314
  %v404 = vpop.f32.mrf.mxu0
  %v405 = vadd.f32 %v336, %v404
  %v406 = vpop.f32.mrf.mxu0
  %407 = vdwg.mxu0
  %408 = vst [vmem:[%s9] sm:$0xff] %v405
  // Predicated region
  $region38: #{mlp_forward.1} parent=0 // pred_check
    _
  $region39: #{mlp_forward.1} parent=0 // pred_check_branch
    %410 = sbr.rel (0) target = $region41
  $region40: #{mlp_forward.1} parent=0 // pred_region
    _
  $region41: #{mlp_forward.1} parent=0 // pred_fallthru
    _
  // Predicated region
  $region42: #{mlp_forward.1} parent=0 // pred_check
    _
  $region43: #{mlp_forward.1} parent=0 // pred_check_branch
    %412 = sbr.rel (0) target = $region45
  $region44: #{mlp_forward.1} parent=0 // pred_region
    _
  $region45: #{mlp_forward.1} parent=0 // pred_fallthru
    _

</llo_original>
